<compile_context>
chip_gen: v5e
topology: v5e:2x2
jax: 0.10.0
libtpu: 0.0.40
codegen_flags: <defaults>
</compile_context>

<pallas_src>
import jax
import jax.numpy as jnp
from jax.experimental import pallas as pl
from jax.experimental.pallas import tpu as pltpu


def _make_conv_gemm_kernel(nb):
    """One grid step handles a batch tile of `nb` images.

    w_ref: (Cout=32, Kp=32)   folded weights; column 27 carries the bias
    p_ref: (nb, Kp=32, HW)    im2col patches; row 27 == 1.0 (bias rider)
    o_ref: (nb, Cout=32, HW)  lane-dense output slab (HW multiple of 128)
    """
    def kernel(w_ref, p_ref, o_ref):
        for n in range(nb):                      # static unroll, nb in {1, 2}
            o_ref[n] = jnp.dot(
                w_ref[...], p_ref[n], preferred_element_type=jnp.float32
            ).astype(o_ref.dtype)
    return kernel


def _num_batch_tiles(n):
    """2-way parallel grid on dual-TensorCore chips (v7x); 1 step elsewhere."""
    try:
        kind = jax.devices()[0].device_kind.lower()
    except Exception:
        kind = ""
    if n % 2 == 0 and ("v7" in kind or "tpu7" in kind):
        return 2
    return 1


def conv2d_3x3_pallas(x_nchw, w_oihw, bias):
    """Conv2d(kernel=3, stride=1, padding=1) as a transposed im2col GEMM."""
    N, Cin, H, W = x_nchw.shape
    Cout = w_oihw.shape[0]
    HW = H * W
    K = Cin * 9                 # 27
    Kp = 32                     # contraction padded; index 27 carries the bias

    # ---- wrapper-side im2col, kept in NCHW (k order = (cin, kh, kw)) ----
    x_pad = jnp.pad(x_nchw, ((0, 0), (0, 0), (1, 1), (1, 1)))
    taps = [x_pad[:, :, kh:kh + H, kw:kw + W]
            for kh in range(3) for kw in range(3)]           # 9 x (N,Cin,H,W)
    patches = jnp.stack(taps, axis=2).reshape(N, K, HW)       # (N, 27, HW)
    patches = jnp.concatenate(
        [patches,
         jnp.ones((N, 1, HW), patches.dtype),                 # bias rider row
         jnp.zeros((N, Kp - K - 1, HW), patches.dtype)],
        axis=1)                                               # (N, 32, HW)

    # ---- fold weights + bias into one (Cout, Kp) tile ----
    w_ck = w_oihw.reshape(Cout, K)                 # k = cin*9 + kh*3 + kw
    w_full = jnp.concatenate(
        [w_ck, bias[:, None], jnp.zeros((Cout, Kp - K - 1), w_ck.dtype)],
        axis=1)                                               # (32, 32)

    num_tiles = _num_batch_tiles(N)
    nb = N // num_tiles

    out = pl.pallas_call(
        _make_conv_gemm_kernel(nb),
        out_shape=jax.ShapeDtypeStruct((N, Cout, HW), x_nchw.dtype),
        grid=(num_tiles,),
        in_specs=[
            pl.BlockSpec((Cout, Kp), lambda i: (0, 0)),       # weight resident
            pl.BlockSpec((nb, Kp, HW), lambda i: (i, 0, 0)),
        ],
        out_specs=pl.BlockSpec((nb, Cout, HW), lambda i: (i, 0, 0)),
        compiler_params=pltpu.CompilerParams(
            dimension_semantics=("parallel",),
        ),
    )(w_full, patches)

    # (N, Cout, H*W) is already NCHW up to a free reshape -- no slice/transpose.
    return out.reshape(N, Cout, H, W)


def model_forward(x, conv_w, conv_b):
    """Mirror Model.forward: (conv2d(cat(split(x))), split(x))."""
    # torch.split(input, [1,1,1], dim=1)
    split_tensors = (x[:, 0:1], x[:, 1:2], x[:, 2:3])
    # torch.cat(split_tensors, dim=1)  -> identity re-assembly
    concatenated = jnp.concatenate(split_tensors, axis=1)
    conv_out = conv2d_3x3_pallas(concatenated, conv_w, conv_b)
    return conv_out, split_tensors


def init_params(key):
    """Deterministic Conv2d(3, 32, 3) parameter init (PyTorch-style uniform)."""
    k_w, k_b = jax.random.split(key)
    cout, cin, kh, kw = 32, 3, 3, 3
    fan_in = cin * kh * kw
    bound = 1.0 / jnp.sqrt(fan_in)
    w = jax.random.uniform(k_w, (cout, cin, kh, kw), jnp.float32, -bound, bound)
    b = jax.random.uniform(k_b, (cout,), jnp.float32, -bound, bound)
    return w, b
    # NOTE: 'add', 'add_1', 'linear', 'conv2d_1' in the ModuleDict are unused
    # in forward(), so they are intentionally not instantiated.


if __name__ == "__main__":
    key = jax.random.PRNGKey(0)
    k_x, k_p = jax.random.split(key)

    N, C, H, W = 2, 3, 16, 16
    x = jax.random.normal(k_x, (N, C, H, W), jnp.float32)
    conv_w, conv_b = init_params(k_p)

    conv_out, splits = jax.jit(model_forward)(x, conv_w, conv_b)
    conv_out = jax.block_until_ready(conv_out)
    splits = jax.block_until_ready(splits)

    # Sanity check against XLA's reference conv (same semantics as torch Conv2d).
    ref = jax.lax.conv_general_dilated(
        x, conv_w, window_strides=(1, 1), padding=((1, 1), (1, 1)),
        dimension_numbers=("NCHW", "OIHW", "NCHW"),
    ) + conv_b.reshape(1, -1, 1, 1)
    assert conv_out.shape == (N, 32, H, W)
    assert all(s.shape == (N, 1, H, W) for s in splits)
    assert jnp.allclose(conv_out, ref, atol=1e-4, rtol=1e-4)

    print("KERNEL_OK")
</pallas_src>

<mosaic_0001>
module attributes {stable_mosaic.version = 11 : i64} {
  func.func @kernel(%arg0: i32, %arg1: memref<32x32xf32, #tpu.memory_space<vmem>>, %arg2: memref<2x32x256xf32, #tpu.memory_space<vmem>>, %arg3: memref<2x32x256xf32, #tpu.memory_space<vmem>>) attributes {dimension_semantics = [#tpu.dimension_semantics<parallel>], iteration_bounds = array<i64: 1>, scalar_prefetch = 0 : i64, scratch_operands = 0 : i64, tpu.core_type = #tpu.core_type<tc>, window_params = [{pipeline_mode = #tpu.pipeline_mode<synchronous>, transform_indices = @transform_0, window_bounds = array<i64: 32, 32>}, {transform_indices = @transform_1, window_bounds = array<i64: 2, 32, 256>}, {transform_indices = @transform_2, window_bounds = array<i64: 2, 32, 256>}]} {
    %c0 = arith.constant 0 : index
    %c0_0 = arith.constant 0 : index
    %0 = vector.load %arg1[%c0, %c0_0] : memref<32x32xf32, #tpu.memory_space<vmem>>, vector<32x32xf32>
    %c0_1 = arith.constant 0 : index
    %c0_2 = arith.constant 0 : index
    %c0_3 = arith.constant 0 : index
    %1 = vector.load %arg2[%c0_1, %c0_2, %c0_3] : memref<2x32x256xf32, #tpu.memory_space<vmem>>, vector<1x32x256xf32>
    %2 = vector.shape_cast %1 : vector<1x32x256xf32> to vector<32x256xf32>
    %cst = arith.constant dense<0.000000e+00> : vector<32x256xf32>
    %3 = tpu.matmul %0, %2, %cst {dimension_numbers = #tpu.dot_dimension_numbers<[1], [0], [0], [1], [0, 0, 1, 1], [], []>} : vector<32x32xf32>, vector<32x256xf32>, vector<32x256xf32> -> vector<32x256xf32>
    %c0_4 = arith.constant 0 : index
    %c0_5 = arith.constant 0 : index
    %c0_6 = arith.constant 0 : index
    %4 = vector.load %arg3[%c0_4, %c0_5, %c0_6] : memref<2x32x256xf32, #tpu.memory_space<vmem>>, vector<1x32x256xf32>
    %5 = vector.shape_cast %4 : vector<1x32x256xf32> to vector<32x256xf32>
    %6 = vector.shape_cast %3 : vector<32x256xf32> to vector<1x32x256xf32>
    tpu.vector_store %arg3[%c0_4, %c0_5, %c0_6], %6 {strides = array<i32>} : memref<2x32x256xf32, #tpu.memory_space<vmem>>, vector<1x32x256xf32>,
    %c0_7 = arith.constant 0 : index
    %c0_8 = arith.constant 0 : index
    %7 = vector.load %arg1[%c0_7, %c0_8] : memref<32x32xf32, #tpu.memory_space<vmem>>, vector<32x32xf32>
    %c1 = arith.constant 1 : index
    %c0_9 = arith.constant 0 : index
    %c0_10 = arith.constant 0 : index
    %8 = vector.load %arg2[%c1, %c0_9, %c0_10] : memref<2x32x256xf32, #tpu.memory_space<vmem>>, vector<1x32x256xf32>
    %9 = vector.shape_cast %8 : vector<1x32x256xf32> to vector<32x256xf32>
    %cst_11 = arith.constant dense<0.000000e+00> : vector<32x256xf32>
    %10 = tpu.matmul %7, %9, %cst_11 {dimension_numbers = #tpu.dot_dimension_numbers<[1], [0], [0], [1], [0, 0, 1, 1], [], []>} : vector<32x32xf32>, vector<32x256xf32>, vector<32x256xf32> -> vector<32x256xf32>
    %c1_12 = arith.constant 1 : index
    %c0_13 = arith.constant 0 : index
    %c0_14 = arith.constant 0 : index
    %11 = vector.load %arg3[%c1_12, %c0_13, %c0_14] : memref<2x32x256xf32, #tpu.memory_space<vmem>>, vector<1x32x256xf32>
    %12 = vector.shape_cast %11 : vector<1x32x256xf32> to vector<32x256xf32>
    %13 = vector.shape_cast %10 : vector<32x256xf32> to vector<1x32x256xf32>
    tpu.vector_store %arg3[%c1_12, %c0_13, %c0_14], %13 {strides = array<i32>} : memref<2x32x256xf32, #tpu.memory_space<vmem>>, vector<1x32x256xf32>,
    return
  }
  func.func @transform_0(%arg0: i32) -> (i32, i32) {
    %c0_i32 = arith.constant 0 : i32
    %c0_i32_0 = arith.constant 0 : i32
    %c0_i32_1 = arith.constant 0 : i32
    return %c0_i32, %c0_i32_0 : i32, i32
  }
  func.func @transform_1(%arg0: i32) -> (i32, i32, i32) {
    %c0_i32 = arith.constant 0 : i32
    %c0_i32_0 = arith.constant 0 : i32
    %c0_i32_1 = arith.constant 0 : i32
    return %arg0, %c0_i32, %c0_i32_0 : i32, i32, i32
  }
  func.func @transform_2(%arg0: i32) -> (i32, i32, i32) {
    %c0_i32 = arith.constant 0 : i32
    %c0_i32_0 = arith.constant 0 : i32
    %c0_i32_1 = arith.constant 0 : i32
    return %arg0, %c0_i32, %c0_i32_0 : i32, i32, i32
  }
}

</mosaic_0001>

<llo_original>
// kernel: model_forward.1
$region0: #{model_forward.1}
  #allocation0 [shape = 'u32[]', space=smem, size = 0x4, offset = 0x4, fixed_abs, tag = 'smem constant byte address 0x4 - core index']
  #allocation1 [shape = 'u32[72,128]{1,0:T(1,128)}', space=vmem, size = 0x9000, scoped, tag = 'internal scratch']
  %s0 = inlined_call_operand.vmem [shape: f32[32,32], index: 0, kind: input, shape index: {}]
  %s1 = inlined_call_operand.vmem [shape: f32[2,32,256], index: 1, kind: input, shape index: {}]
  %s2 = inlined_call_operand.vmem [shape: f32[2,32,256], index: 2, kind: output, shape index: {}]
  %s3 = sld [smem:[#allocation0]]
  $region18: #{model_forward.1} parent=0
    _
  %s5 = ssub.s32 1, %s3
  %s6 = scalar_select 0, %s5, %s3
  // Predicated region
  $region2: #{model_forward.1} parent=0 // pred_check
    _
  $region3: #{model_forward.1} parent=0 // pred_check_branch
    %8 = sbr.rel (0) target = $region5
  $region4: #{model_forward.1} parent=0 // pred_region
    _
  $region5: #{model_forward.1} parent=0 // pred_fallthru
    _
  // Predicated region
  $region6: #{model_forward.1} parent=0 // pred_check
    _
  $region7: #{model_forward.1} parent=0 // pred_check_branch
    %10 = sbr.rel (0) target = $region9
  $region8: #{model_forward.1} parent=0 // pred_region
    _
  $region9: #{model_forward.1} parent=0 // pred_fallthru
    _
  %v11 = vld [vmem:[%s0] sm:$0xff]
  %v12 = vld [vmem:[%s0 + $0x8] sm:$0xff]
  %v13 = vld [vmem:[%s0 + $0x10] sm:$0xff]
  %v14 = vld [vmem:[%s0 + $0x18] sm:$0xff]
  %v15 = vld [vmem:[%s1] sm:$0xff]
  %v16 = vld [vmem:[%s1 + $0x8] sm:$0xff]
  %v17 = vld [vmem:[%s1 + $0x10] sm:$0xff]
  %v18 = vld [vmem:[%s1 + $0x18] sm:$0xff]
  %v19 = vld [vmem:[%s1 + $0x20] sm:$0xff]
  %v20 = vld [vmem:[%s1 + $0x28] sm:$0xff]
  %v21 = vld [vmem:[%s1 + $0x30] sm:$0xff]
  %v22 = vld [vmem:[%s1 + $0x38] sm:$0xff]
  %vm23 = vcmask 261120
  %v25 = vsel %vm23, %v11, 0
  %v28 = vsel %vm23, %v12, 0
  %v31 = vsel %vm23, %v13, 0
  %v34 = vsel %vm23, %v14, 0
  %36 = vmatpush.msra.mxu0 0.0
  %37 = vmatpush.msra.mxu0 0.0
  %38 = vmatpush.msra.mxu0 0.0
  %39 = vmatpush.msra.mxu0 0.0
  %40 = vmatpush.msra.mxu0 0.0
  %41 = vmatpush.msra.mxu0 0.0
  %42 = vmatpush.msra.mxu0 0.0
  %43 = vmatpush.msra.mxu0 0.0
  %44 = vmatpush.msra.mxu0 0.0
  %45 = vmatpush.msra.mxu0 0.0
  %46 = vmatpush.msra.mxu0 0.0
  %47 = vmatpush.msra.mxu0 0.0
  %48 = vmatpush.msra.mxu0 %v21
  %49 = vmatpush.msra.mxu0 %v19
  %50 = vmatpush.msra.mxu0 %v17
  %51 = vmatpush.msra.mxu0 %v15
  %52 = vmatmul.f32.gmra.mxu0 %v25
  %v53 = vpop.f32.mrf.mxu0
  %v54 = vadd.f32 0.0, %v53
  %55 = vmatmul.f32.gmra.mxu0 %v28
  %v56 = vpop.f32.mrf.mxu0
  %v57 = vadd.f32 0.0, %v56
  %58 = vmatmul.f32.gmra.mxu0 %v31
  %v59 = vpop.f32.mrf.mxu0
  %v60 = vadd.f32 0.0, %v59
  %61 = vmatmul.f32.gmra.mxu0 %v34
  %v62 = vpop.f32.mrf.mxu0
  %v63 = vadd.f32 0.0, %v62
  %64 = vdwg.mxu0
  %65 = vmatpush.msra.mxu0 0.0
  %66 = vmatpush.msra.mxu0 0.0
  %67 = vmatpush.msra.mxu0 0.0
  %68 = vmatpush.msra.mxu0 0.0
  %69 = vmatpush.msra.mxu0 0.0
  %70 = vmatpush.msra.mxu0 0.0
  %71 = vmatpush.msra.mxu0 0.0
  %72 = vmatpush.msra.mxu0 0.0
  %73 = vmatpush.msra.mxu0 0.0
  %74 = vmatpush.msra.mxu0 0.0
  %75 = vmatpush.msra.mxu0 0.0
  %76 = vmatpush.msra.mxu0 0.0
  %77 = vmatpush.msra.mxu0 %v22
  %78 = vmatpush.msra.mxu0 %v20
  %79 = vmatpush.msra.mxu0 %v18
  %80 = vmatpush.msra.mxu0 %v16
  %81 = vmatmul.f32.gmra.mxu0 %v25
  %v82 = vpop.f32.mrf.mxu0
  %v83 = vadd.f32 0.0, %v82
  %84 = vmatmul.f32.gmra.mxu0 %v28
  %v85 = vpop.f32.mrf.mxu0
  %v86 = vadd.f32 0.0, %v85
  %87 = vmatmul.f32.gmra.mxu0 %v31
  %v88 = vpop.f32.mrf.mxu0
  %v89 = vadd.f32 0.0, %v88
  %90 = vmatmul.f32.gmra.mxu0 %v34
  %v91 = vpop.f32.mrf.mxu0
  %v92 = vadd.f32 0.0, %v91
  %93 = vdwg.mxu0
  %94 = vst [vmem:[%s2] sm:$0xff] %v54
  %95 = vst [vmem:[%s2 + $0x8] sm:$0xff] %v83
  %96 = vst [vmem:[%s2 + $0x10] sm:$0xff] %v57
  %97 = vst [vmem:[%s2 + $0x18] sm:$0xff] %v86
  %98 = vst [vmem:[%s2 + $0x20] sm:$0xff] %v60
  %99 = vst [vmem:[%s2 + $0x28] sm:$0xff] %v89
  %100 = vst [vmem:[%s2 + $0x30] sm:$0xff] %v63
  %101 = vst [vmem:[%s2 + $0x38] sm:$0xff] %v92
  %v102 = vld [vmem:[%s0] sm:$0xff]
  %v103 = vld [vmem:[%s0 + $0x8] sm:$0xff]
  %v104 = vld [vmem:[%s0 + $0x10] sm:$0xff]
  %v105 = vld [vmem:[%s0 + $0x18] sm:$0xff]
  %s106 = scalar_lea.vmem %s1, 64
  %v107 = vld [vmem:[%s106] sm:$0xff]
  %v108 = vld [vmem:[%s106 + $0x8] sm:$0xff]
  %v109 = vld [vmem:[%s106 + $0x10] sm:$0xff]
  %v110 = vld [vmem:[%s106 + $0x18] sm:$0xff]
  %v111 = vld [vmem:[%s106 + $0x20] sm:$0xff]
  %v112 = vld [vmem:[%s106 + $0x28] sm:$0xff]
  %v113 = vld [vmem:[%s106 + $0x30] sm:$0xff]
  %v114 = vld [vmem:[%s106 + $0x38] sm:$0xff]
  %v116 = vsel %vm23, %v102, 0
  %v119 = vsel %vm23, %v103, 0
  %v122 = vsel %vm23, %v104, 0
  %v125 = vsel %vm23, %v105, 0
  %127 = vmatpush.msra.mxu0 0.0
  %128 = vmatpush.msra.mxu0 0.0
  %129 = vmatpush.msra.mxu0 0.0
  %130 = vmatpush.msra.mxu0 0.0
  %131 = vmatpush.msra.mxu0 0.0
  %132 = vmatpush.msra.mxu0 0.0
  %133 = vmatpush.msra.mxu0 0.0
  %134 = vmatpush.msra.mxu0 0.0
  %135 = vmatpush.msra.mxu0 0.0
  %136 = vmatpush.msra.mxu0 0.0
  %137 = vmatpush.msra.mxu0 0.0
  %138 = vmatpush.msra.mxu0 0.0
  %139 = vmatpush.msra.mxu0 %v113
  %140 = vmatpush.msra.mxu0 %v111
  %141 = vmatpush.msra.mxu0 %v109
  %142 = vmatpush.msra.mxu0 %v107
  %143 = vmatmul.f32.gmra.mxu0 %v116
  %v144 = vpop.f32.mrf.mxu0
  %v145 = vadd.f32 0.0, %v144
  %146 = vmatmul.f32.gmra.mxu0 %v119
  %v147 = vpop.f32.mrf.mxu0
  %v148 = vadd.f32 0.0, %v147
  %149 = vmatmul.f32.gmra.mxu0 %v122
  %v150 = vpop.f32.mrf.mxu0
  %v151 = vadd.f32 0.0, %v150
  %152 = vmatmul.f32.gmra.mxu0 %v125
  %v153 = vpop.f32.mrf.mxu0
  %v154 = vadd.f32 0.0, %v153
  %155 = vdwg.mxu0
  %156 = vmatpush.msra.mxu0 0.0
  %157 = vmatpush.msra.mxu0 0.0
  %158 = vmatpush.msra.mxu0 0.0
  %159 = vmatpush.msra.mxu0 0.0
  %160 = vmatpush.msra.mxu0 0.0
  %161 = vmatpush.msra.mxu0 0.0
  %162 = vmatpush.msra.mxu0 0.0
  %163 = vmatpush.msra.mxu0 0.0
  %164 = vmatpush.msra.mxu0 0.0
  %165 = vmatpush.msra.mxu0 0.0
  %166 = vmatpush.msra.mxu0 0.0
  %167 = vmatpush.msra.mxu0 0.0
  %168 = vmatpush.msra.mxu0 %v114
  %169 = vmatpush.msra.mxu0 %v112
  %170 = vmatpush.msra.mxu0 %v110
  %171 = vmatpush.msra.mxu0 %v108
  %172 = vmatmul.f32.gmra.mxu0 %v116
  %v173 = vpop.f32.mrf.mxu0
  %v174 = vadd.f32 0.0, %v173
  %175 = vmatmul.f32.gmra.mxu0 %v119
  %v176 = vpop.f32.mrf.mxu0
  %v177 = vadd.f32 0.0, %v176
  %178 = vmatmul.f32.gmra.mxu0 %v122
  %v179 = vpop.f32.mrf.mxu0
  %v180 = vadd.f32 0.0, %v179
  %181 = vmatmul.f32.gmra.mxu0 %v125
  %v182 = vpop.f32.mrf.mxu0
  %v183 = vadd.f32 0.0, %v182
  %184 = vdwg.mxu0
  %s185 = scalar_lea.vmem %s2, 64
  %186 = vst [vmem:[%s185] sm:$0xff] %v145
  %187 = vst [vmem:[%s185 + $0x8] sm:$0xff] %v174
  %188 = vst [vmem:[%s185 + $0x10] sm:$0xff] %v148
  %189 = vst [vmem:[%s185 + $0x18] sm:$0xff] %v177
  %190 = vst [vmem:[%s185 + $0x20] sm:$0xff] %v151
  %191 = vst [vmem:[%s185 + $0x28] sm:$0xff] %v180
  %192 = vst [vmem:[%s185 + $0x30] sm:$0xff] %v154
  %193 = vst [vmem:[%s185 + $0x38] sm:$0xff] %v183
  // Predicated region
  $region10: #{model_forward.1} parent=0 // pred_check
    _
  $region11: #{model_forward.1} parent=0 // pred_check_branch
    %195 = sbr.rel (0) target = $region13
  $region12: #{model_forward.1} parent=0 // pred_region
    _
  $region13: #{model_forward.1} parent=0 // pred_fallthru
    _
  // Predicated region
  $region14: #{model_forward.1} parent=0 // pred_check
    _
  $region15: #{model_forward.1} parent=0 // pred_check_branch
    %197 = sbr.rel (0) target = $region17
  $region16: #{model_forward.1} parent=0 // pred_region
    _
  $region17: #{model_forward.1} parent=0 // pred_fallthru
    _

</llo_original>
